<compile_context>
chip_gen: v7x
topology: tpu7x:2x2x1
jax: 0.10.0
libtpu: 0.0.40
codegen_flags: <defaults>
</compile_context>

<pallas_src>
import functools

import jax
import jax.numpy as jnp
from jax.experimental import pallas as pl
from jax.experimental.pallas import tpu as pltpu


def _round_up(x, m):
    return ((x + m - 1) // m) * m


def _pick_hw_tile(hw, c, itemsize, *, max_hw_tile=2048,
                  block_budget_bytes=4 * 1024 * 1024):
    """Largest multiple-of-128 spatial tile whose (1, C, tile) block stays
    under `block_budget_bytes`, so (in + out) double-buffered blocks fit the
    default scoped-VMEM limit with headroom on every chip generation."""
    cap_by_vmem = max(128, (block_budget_bytes // (c * itemsize)) // 128 * 128)
    tile = min(max_hw_tile, cap_by_vmem, _round_up(hw, 128))
    return max(128, tile // 128 * 128)


# ---------------------------------------------------------------------------
# Pass 1: global average pool (reduction over HW tiles) + gate MLP at finalize
# ---------------------------------------------------------------------------
def _se_pool_gate_kernel(x_ref, w1t_ref, b1_ref, w2t_ref, b2_ref, s_ref,
                         acc_ref, *, inv_hw):
    # x_ref:   (1, C, T)   current spatial tile of sample n
    # w1t_ref: (C, Cb)     pre-transposed Linear1 weight (resident block)
    # b1_ref:  (1, Cb)
    # w2t_ref: (Cb, C)     pre-transposed Linear2 weight
    # b2_ref:  (1, C)
    # s_ref:   (1, C, 1)   f32 gate output for sample n (accumulator-resident)
    # acc_ref: (1, C) f32  running spatial sum (scratch)
    k = pl.program_id(1)

    @pl.when(k == 0)
    def _():
        acc_ref[...] = jnp.zeros_like(acc_ref)

    # f32 accumulation without materializing a full-tile f32 copy of x.
    acc_ref[...] += jnp.sum(x_ref[...], axis=-1, dtype=jnp.float32)

    @pl.when(k == pl.num_programs(1) - 1)
    def _():
        pooled = acc_ref[...] * inv_hw                               # (1, C)
        h = jnp.dot(pooled, w1t_ref[...],
                    preferred_element_type=jnp.float32) + b1_ref[...]
        h = jnp.maximum(h, 0.0)                                      # (1, Cb)
        z = jnp.dot(h, w2t_ref[...],
                    preferred_element_type=jnp.float32) + b2_ref[...]
        s_ref[...] = jax.nn.sigmoid(z)[:, :, None]                   # (1, C, 1)


# ---------------------------------------------------------------------------
# Pass 2: streaming elementwise scale  o = x * s
# ---------------------------------------------------------------------------
def _se_scale_kernel(x_ref, s_ref, o_ref):
    # x_ref: (1, C, T), s_ref: (1, C, 1) f32 (C on sublanes -> broadcast over
    # lanes is free), o_ref: (1, C, T) lane-dense.
    o_ref[...] = x_ref[...] * s_ref[...].astype(o_ref.dtype)


def squeeze_excitation(x, w1, b1, w2, b2, *, max_hw_tile=2048):
    """x: (N, C, H, W).  w1: (Cb, C), b1: (Cb,), w2: (C, Cb), b2: (C,)."""
    N, C, H, W = x.shape
    hw = H * W

    # Lane-dense spatial tiling: tile is a multiple of 128 and sized so the
    # double-buffered (1, C, tile) in+out blocks fit comfortably in VMEM.
    tile = _pick_hw_tile(hw, C, x.dtype.itemsize, max_hw_tile=max_hw_tile)
    hwp = _round_up(hw, tile)
    num_t = hwp // tile

    x_flat = x.reshape(N, C, hw)
    if hwp != hw:
        # Zero padding: contributes nothing to the pooled sum; sliced off at
        # the end so the padded lanes never reach the caller.
        x_flat = jnp.pad(x_flat, ((0, 0), (0, 0), (0, hwp - hw)))

    # Pre-transpose weights once in plain JAX (no in-kernel XLU transpose).
    w1t = jnp.asarray(w1, jnp.float32).T   # (C, Cb)
    w2t = jnp.asarray(w2, jnp.float32).T   # (Cb, C)
    b1_2d = jnp.asarray(b1, jnp.float32).reshape(1, -1)   # (1, Cb)
    b2_2d = jnp.asarray(b2, jnp.float32).reshape(1, -1)   # (1, C)
    Cb = w1t.shape[1]

    # ---- Pass 1: per-(sample, channel) gate s of shape (N, C, 1), f32 ------
    gate = pl.pallas_call(
        functools.partial(_se_pool_gate_kernel, inv_hw=1.0 / float(hw)),
        out_shape=jax.ShapeDtypeStruct((N, C, 1), jnp.float32),
        grid_spec=pltpu.PrefetchScalarGridSpec(
            num_scalar_prefetch=0,
            grid=(N, num_t),
            in_specs=[
                pl.BlockSpec((1, C, tile), lambda n, k: (n, 0, k)),   # x tile
                pl.BlockSpec((C, Cb), lambda n, k: (0, 0)),           # w1^T (resident)
                pl.BlockSpec((1, Cb), lambda n, k: (0, 0)),           # b1
                pl.BlockSpec((Cb, C), lambda n, k: (0, 0)),           # w2^T
                pl.BlockSpec((1, C), lambda n, k: (0, 0)),            # b2
            ],
            out_specs=pl.BlockSpec((1, C, 1), lambda n, k: (n, 0, 0)),
            scratch_shapes=[pltpu.VMEM((1, C), jnp.float32)],
        ),
        compiler_params=pltpu.CompilerParams(
            dimension_semantics=("parallel", "arbitrary")),
    )(x_flat, w1t, b1_2d, w2t, b2_2d)

    # ---- Pass 2: streaming scale at HBM roofline ---------------------------
    out_flat = pl.pallas_call(
        _se_scale_kernel,
        out_shape=jax.ShapeDtypeStruct((N, C, hwp), x.dtype),
        grid_spec=pltpu.PrefetchScalarGridSpec(
            num_scalar_prefetch=0,
            grid=(N, num_t),
            in_specs=[
                pl.BlockSpec((1, C, tile), lambda n, k: (n, 0, k)),   # x tile
                pl.BlockSpec((1, C, 1), lambda n, k: (n, 0, 0)),      # gate row
            ],
            out_specs=pl.BlockSpec((1, C, tile), lambda n, k: (n, 0, k)),
        ),
        compiler_params=pltpu.CompilerParams(
            dimension_semantics=("parallel", "parallel")),
    )(x_flat, gate)

    if hwp != hw:
        out_flat = out_flat[:, :, :hw]
    return out_flat.reshape(N, C, H, W)


def init_params(key, input_channels, bottleneck_ratio=2):
    """Deterministic init matching nn.Linear shapes (weights are (out, in))."""
    cb = input_channels // bottleneck_ratio
    k1, k2, k3, k4 = jax.random.split(key, 4)
    bound1 = 1.0 / jnp.sqrt(input_channels)
    bound2 = 1.0 / jnp.sqrt(cb)
    w1 = jax.random.uniform(k1, (cb, input_channels), jnp.float32, -bound1, bound1)
    b1 = jax.random.uniform(k2, (cb,), jnp.float32, -bound1, bound1)
    w2 = jax.random.uniform(k3, (input_channels, cb), jnp.float32, -bound2, bound2)
    b2 = jax.random.uniform(k4, (input_channels,), jnp.float32, -bound2, bound2)
    return w1, b1, w2, b2


if __name__ == "__main__":
    key = jax.random.PRNGKey(0)
    k_x, k_p = jax.random.split(key)

    N, C, H, W = 2, 4, 16, 16
    x = jax.random.normal(k_x, (N, C, H, W), dtype=jnp.float32)
    w1, b1, w2, b2 = init_params(k_p, C, bottleneck_ratio=2)

    out = squeeze_excitation(x, w1, b1, w2, b2)
    jax.block_until_ready(out)

    # Pure-JAX reference (same math as the PyTorch forward).
    pooled = jnp.mean(x, axis=(2, 3))
    h = jnp.maximum(pooled @ w1.T + b1, 0.0)
    s = jax.nn.sigmoid(h @ w2.T + b2)
    ref = x * s[:, :, None, None]
    assert jnp.allclose(out, ref, atol=1e-5, rtol=1e-5), "mismatch vs reference"

    print("KERNEL_OK")
</pallas_src>

<mosaic_0001>
module attributes {stable_mosaic.version = 11 : i64} {
  func.func @_se_pool_gate_kernel(%arg0: i32, %arg1: i32, %arg2: memref<1x4x256xf32, #tpu.memory_space<vmem>>, %arg3: memref<4x2xf32, #tpu.memory_space<vmem>>, %arg4: memref<1x2xf32, #tpu.memory_space<vmem>>, %arg5: memref<2x4xf32, #tpu.memory_space<vmem>>, %arg6: memref<1x4xf32, #tpu.memory_space<vmem>>, %arg7: memref<1x4x1xf32, #tpu.memory_space<vmem>>, %arg8: memref<1x4xf32, #tpu.memory_space<vmem>>) attributes {dimension_semantics = [#tpu.dimension_semantics<parallel>, #tpu.dimension_semantics<arbitrary>], iteration_bounds = array<i64: 2, 1>, scalar_prefetch = 0 : i64, scratch_operands = 1 : i64, tpu.core_type = #tpu.core_type<tc>, window_params = [{transform_indices = @transform_0, window_bounds = array<i64: 1, 4, 256>}, {pipeline_mode = #tpu.pipeline_mode<synchronous>, transform_indices = @transform_1, window_bounds = array<i64: 4, 2>}, {pipeline_mode = #tpu.pipeline_mode<synchronous>, transform_indices = @transform_2, window_bounds = array<i64: 1, 2>}, {pipeline_mode = #tpu.pipeline_mode<synchronous>, transform_indices = @transform_3, window_bounds = array<i64: 2, 4>}, {pipeline_mode = #tpu.pipeline_mode<synchronous>, transform_indices = @transform_4, window_bounds = array<i64: 1, 4>}, {transform_indices = @transform_5, window_bounds = array<i64: 1, 4, 1>}]} {
    %c0_i32 = arith.constant 0 : i32
    %0 = arith.cmpi eq, %arg1, %c0_i32 : i32
    %1 = arith.extui %0 : i1 to i32
    %c0_i32_0 = arith.constant 0 : i32
    %2 = arith.cmpi ne, %1, %c0_i32_0 : i32
    scf.if %2 {
      %cst_9 = arith.constant 0.000000e+00 : f32
      %11 = vector.broadcast %cst_9 : f32 to vector<1x4xf32>
      %c0_10 = arith.constant 0 : index
      %c0_11 = arith.constant 0 : index
      %12 = vector.load %arg8[%c0_10, %c0_11] : memref<1x4xf32, #tpu.memory_space<vmem>>, vector<1x4xf32>
      tpu.vector_store %arg8[%c0_10, %c0_11], %11 {strides = array<i32>} : memref<1x4xf32, #tpu.memory_space<vmem>>, vector<1x4xf32>,
    } else {
    }
    %c0 = arith.constant 0 : index
    %c0_1 = arith.constant 0 : index
    %3 = vector.load %arg8[%c0, %c0_1] : memref<1x4xf32, #tpu.memory_space<vmem>>, vector<1x4xf32>
    %c0_2 = arith.constant 0 : index
    %c0_3 = arith.constant 0 : index
    %c0_4 = arith.constant 0 : index
    %4 = vector.load %arg2[%c0_2, %c0_3, %c0_4] : memref<1x4x256xf32, #tpu.memory_space<vmem>>, vector<1x4x256xf32>
    %cst = arith.constant dense<0.000000e+00> : vector<1x4xf32>
    %5 = vector.multi_reduction <add>, %4, %cst [2] : vector<1x4x256xf32> to vector<1x4xf32>
    %6 = arith.addf %3, %5 : vector<1x4xf32>
    %c0_5 = arith.constant 0 : index
    %c0_6 = arith.constant 0 : index
    %7 = vector.load %arg8[%c0_5, %c0_6] : memref<1x4xf32, #tpu.memory_space<vmem>>, vector<1x4xf32>
    tpu.vector_store %arg8[%c0_5, %c0_6], %6 {strides = array<i32>} : memref<1x4xf32, #tpu.memory_space<vmem>>, vector<1x4xf32>,
    %c0_i32_7 = arith.constant 0 : i32
    %8 = arith.cmpi eq, %arg1, %c0_i32_7 : i32
    %9 = arith.extui %8 : i1 to i32
    %c0_i32_8 = arith.constant 0 : i32
    %10 = arith.cmpi ne, %9, %c0_i32_8 : i32
    scf.if %10 {
      %c0_9 = arith.constant 0 : index
      %c0_10 = arith.constant 0 : index
      %11 = vector.load %arg8[%c0_9, %c0_10] : memref<1x4xf32, #tpu.memory_space<vmem>>, vector<1x4xf32>
      %cst_11 = arith.constant 3.906250e-03 : f32
      %12 = vector.broadcast %cst_11 : f32 to vector<1x4xf32>
      %13 = arith.mulf %11, %12 : vector<1x4xf32>
      %c0_12 = arith.constant 0 : index
      %c0_13 = arith.constant 0 : index
      %14 = vector.load %arg3[%c0_12, %c0_13] : memref<4x2xf32, #tpu.memory_space<vmem>>, vector<4x2xf32>
      %cst_14 = arith.constant dense<0.000000e+00> : vector<1x2xf32>
      %15 = tpu.matmul %13, %14, %cst_14 {dimension_numbers = #tpu.dot_dimension_numbers<[1], [0], [0], [1], [0, 0, 1, 1], [], []>} : vector<1x4xf32>, vector<4x2xf32>, vector<1x2xf32> -> vector<1x2xf32>
      %c0_15 = arith.constant 0 : index
      %c0_16 = arith.constant 0 : index
      %16 = vector.load %arg4[%c0_15, %c0_16] : memref<1x2xf32, #tpu.memory_space<vmem>>, vector<1x2xf32>
      %17 = arith.addf %15, %16 : vector<1x2xf32>
      %cst_17 = arith.constant 0.000000e+00 : f32
      %18 = vector.broadcast %cst_17 : f32 to vector<1x2xf32>
      %19 = arith.maximumf %17, %18 : vector<1x2xf32>
      %c0_18 = arith.constant 0 : index
      %c0_19 = arith.constant 0 : index
      %20 = vector.load %arg5[%c0_18, %c0_19] : memref<2x4xf32, #tpu.memory_space<vmem>>, vector<2x4xf32>
      %cst_20 = arith.constant dense<0.000000e+00> : vector<1x4xf32>
      %21 = tpu.matmul %19, %20, %cst_20 {dimension_numbers = #tpu.dot_dimension_numbers<[1], [0], [0], [1], [0, 0, 1, 1], [], []>} : vector<1x2xf32>, vector<2x4xf32>, vector<1x4xf32> -> vector<1x4xf32>
      %c0_21 = arith.constant 0 : index
      %c0_22 = arith.constant 0 : index
      %22 = vector.load %arg6[%c0_21, %c0_22] : memref<1x4xf32, #tpu.memory_space<vmem>>, vector<1x4xf32>
      %23 = arith.addf %21, %22 : vector<1x4xf32>
      %24 = arith.negf %23 : vector<1x4xf32>
      %25 = math.exp %24 : vector<1x4xf32>
      %cst_23 = arith.constant 1.000000e+00 : f32
      %26 = vector.broadcast %cst_23 : f32 to vector<1x4xf32>
      %27 = arith.addf %26, %25 : vector<1x4xf32>
      %28 = arith.divf %26, %27 : vector<1x4xf32>
      %29 = vector.shape_cast %28 : vector<1x4xf32> to vector<1x4x1xf32>
      %c0_24 = arith.constant 0 : index
      %c0_25 = arith.constant 0 : index
      %c0_26 = arith.constant 0 : index
      %30 = vector.load %arg7[%c0_24, %c0_25, %c0_26] : memref<1x4x1xf32, #tpu.memory_space<vmem>>, vector<1x4x1xf32>
      tpu.vector_store %arg7[%c0_24, %c0_25, %c0_26], %29 {strides = array<i32>} : memref<1x4x1xf32, #tpu.memory_space<vmem>>, vector<1x4x1xf32>,
    } else {
    }
    return
  }
  func.func @transform_0(%arg0: i32, %arg1: i32) -> (i32, i32, i32) {
    %c0_i32 = arith.constant 0 : i32
    %c0_i32_0 = arith.constant 0 : i32
    return %arg0, %c0_i32, %arg1 : i32, i32, i32
  }
  func.func @transform_1(%arg0: i32, %arg1: i32) -> (i32, i32) {
    %c0_i32 = arith.constant 0 : i32
    %c0_i32_0 = arith.constant 0 : i32
    %c0_i32_1 = arith.constant 0 : i32
    return %c0_i32, %c0_i32_0 : i32, i32
  }
  func.func @transform_2(%arg0: i32, %arg1: i32) -> (i32, i32) {
    %c0_i32 = arith.constant 0 : i32
    %c0_i32_0 = arith.constant 0 : i32
    %c0_i32_1 = arith.constant 0 : i32
    return %c0_i32, %c0_i32_0 : i32, i32
  }
  func.func @transform_3(%arg0: i32, %arg1: i32) -> (i32, i32) {
    %c0_i32 = arith.constant 0 : i32
    %c0_i32_0 = arith.constant 0 : i32
    %c0_i32_1 = arith.constant 0 : i32
    return %c0_i32, %c0_i32_0 : i32, i32
  }
  func.func @transform_4(%arg0: i32, %arg1: i32) -> (i32, i32) {
    %c0_i32 = arith.constant 0 : i32
    %c0_i32_0 = arith.constant 0 : i32
    %c0_i32_1 = arith.constant 0 : i32
    return %c0_i32, %c0_i32_0 : i32, i32
  }
  func.func @transform_5(%arg0: i32, %arg1: i32) -> (i32, i32, i32) {
    %c0_i32 = arith.constant 0 : i32
    %c0_i32_0 = arith.constant 0 : i32
    %c0_i32_1 = arith.constant 0 : i32
    return %arg0, %c0_i32, %c0_i32_0 : i32, i32, i32
  }
}

</mosaic_0001>

<llo_original>
// kernel: tpu_custom_call.1
$region0: #{tpu_custom_call.1}
  #allocation0 [shape = 'u32[]', space=smem, size = 0x4, offset = 0x4, fixed_abs, tag = 'smem constant byte address 0x4 - core index']
  #allocation1 [shape = 'u32[144,128]{1,0:T(1,128)}', space=vmem, size = 0x12000, scoped, tag = 'internal scratch']
  #allocation2 [shape = 'f32[1,4]{1,0:T(1,128)}', space=vmem, size = 0x200, scoped, tag = 'scratch operand']
  %s0 = inlined_call_operand.hbm [shape: f32[2,4,256], index: 0, kind: input, shape index: {}]
  %s1 = inlined_call_operand.vmem [shape: f32[4,2], index: 1, kind: input, shape index: {}]
  %s2 = inlined_call_operand.vmem [shape: f32[1,2], index: 2, kind: input, shape index: {}]
  %s3 = inlined_call_operand.vmem [shape: f32[2,4], index: 3, kind: input, shape index: {}]
  %s4 = inlined_call_operand.vmem [shape: f32[1,4], index: 4, kind: input, shape index: {}]
  %s5 = inlined_call_operand.vmem [shape: f32[2,4,1], index: 5, kind: output, shape index: {}]
  %s6 = sld [smem:[#allocation0]]
  $region65: #{tpu_custom_call.1} parent=0
    _
  %s8 = ssub.s32 1, %s6
  %s9 = scalar_select 0, %s8, %s6
  $region1: #{tpu_custom_call.1} parent=0
    #allocation3 [shape = 'u8[8192]{0}', space=vmem, size = 0x2000, scoped, tag = 'input window, operand 0']
    #allocation4 [shape = 's32[2]{0}', space=sflag, size = 0x8, scoped, tag = 'scoped memory for tpu_custom_call.1']
    %10 = vsyncpa [#allocation4], 0
    %s11 = scalar_lea.sflag [#allocation4], 1
    %12 = vsyncpa %s11, 0
    loop: start=0, step=1, limit=4
    $region2: #{tpu_custom_call.1} parent=1 // loop_pre_header
      _
    $region3: #{tpu_custom_call.1} parent=1 // loop_header
      %s14 = sphi 0, %s18
      %p15 = scmp.ge.s32.totalorder %s14, 4
      %s21 = sphi 0, %s33
      %s22 = sphi 0, %s29
      %s23 = sphi 0, %s21
      %s24 = sphi 0, %s22
      %s25 = sphi 0, %s23
      %s26 = sphi 0, %s24
      %s38 = sphi 0, %s40
      %s41 = sphi 0, %s38
      %s42 = sphi 0, %s41
      %s58 = sphi 0, %s42
      %s62 = sphi 0, %s62
      %s64 = sphi 0, %s62
      %s65 = sphi 0, %s64
      %s79 = sphi 0, %s65
      %s83 = sphi 0, %s83
      %s85 = sphi 0, %s83
      %s86 = sphi 0, %s85
      %s100 = sphi 0, %s86
      %s104 = sphi 0, %s104
      %s106 = sphi 0, %s104
      %s107 = sphi 0, %s106
      %s121 = sphi 0, %s107
      %s125 = sphi 0, %s125
      %s127 = sphi 0, %s125
      %s128 = sphi 0, %s127
      %s142 = sphi 0, %s128
      %s148 = sphi 0, %s150
      %s151 = sphi 0, %s148
      %s152 = sphi 0, %s151
      %s168 = sphi 0, %s152
    $region4: #{tpu_custom_call.1} parent=1 // loop_header_branch
      %17 = sbr.rel (%p15) target = $region8
    $region5: #{tpu_custom_call.1} parent=1 // loop_body
      %s19 = ssub.s32 %s14, 1
      %s20 = ssub.s32 %s14, 2
      %s27 = sadd.s32 1, %s22
      %p28 = scmp.ge.s32.totalorder %s27, 1
      %s29 = scalar_select %p28, 0, %s27
      %s30 = sadd.s32 1, %s21
      %s31 = scalar_select %p28, %s30, %s21
      %p32 = scmp.ge.s32.totalorder %s31, 2
      %s33 = scalar_select %p32, 0, %s31
      %s34 = ssub.s32 %s21, %s33
      %s35 = ssub.s32 %s22, %s29
      %s36 = sor.u32 %s34, %s35
      %p37 = scmp.eq.s32.totalorder %s36, 0
      %s39 = sadd.s32 %s38, 1
      %s40 = scalar_select %p37, %s38, %s39
      %p43 = pneg %p37
      %p44 = scmp.eq.s32.totalorder %s14, 1
      %p45 = por %p43, %p44
      %p46 = scmp.ne.s32.totalorder %s38, %s41
      %p47 = scmp.eq.s32.totalorder %s14, 0
      %p48 = por %p46, %p47
      %p49 = scmp.ne.s32.totalorder %s38, %s41
      %p50 = scmp.eq.s32.totalorder %s19, 1
      %p51 = por %p49, %p50
      %p52 = scmp.ne.s32.totalorder %s41, %s42
      %p53 = scmp.eq.s32.totalorder %s19, 0
      %p54 = por %p52, %p53
      %p55 = scmp.ne.s32.totalorder %s41, %s42
      %p56 = scmp.eq.s32.totalorder %s20, 1
      %p57 = por %p55, %p56
      %p59 = scmp.ne.s32.totalorder %s42, %s58
      %p60 = scmp.eq.s32.totalorder %s20, 0
      %p61 = por %p59, %p60
      %s63 = sadd.s32 %s62, 1
      %p66 = scmp.eq.s32.totalorder %s14, 1
      %p67 = scmp.ne.s32.totalorder %s62, %s64
      %p68 = scmp.eq.s32.totalorder %s14, 0
      %p69 = por %p67, %p68
      %p70 = scmp.ne.s32.totalorder %s62, %s64
      %p71 = scmp.eq.s32.totalorder %s19, 1
      %p72 = por %p70, %p71
      %p73 = scmp.ne.s32.totalorder %s64, %s65
      %p74 = scmp.eq.s32.totalorder %s19, 0
      %p75 = por %p73, %p74
      %p76 = scmp.ne.s32.totalorder %s64, %s65
      %p77 = scmp.eq.s32.totalorder %s20, 1
      %p78 = por %p76, %p77
      %p80 = scmp.ne.s32.totalorder %s65, %s79
      %p81 = scmp.eq.s32.totalorder %s20, 0
      %p82 = por %p80, %p81
      %s84 = sadd.s32 %s83, 1
      %p87 = scmp.eq.s32.totalorder %s14, 1
      %p88 = scmp.ne.s32.totalorder %s83, %s85
      %p89 = scmp.eq.s32.totalorder %s14, 0
      %p90 = por %p88, %p89
      %p91 = scmp.ne.s32.totalorder %s83, %s85
      %p92 = scmp.eq.s32.totalorder %s19, 1
      %p93 = por %p91, %p92
      %p94 = scmp.ne.s32.totalorder %s85, %s86
      %p95 = scmp.eq.s32.totalorder %s19, 0
      %p96 = por %p94, %p95
      %p97 = scmp.ne.s32.totalorder %s85, %s86
      %p98 = scmp.eq.s32.totalorder %s20, 1
      %p99 = por %p97, %p98
      %p101 = scmp.ne.s32.totalorder %s86, %s100
      %p102 = scmp.eq.s32.totalorder %s20, 0
      %p103 = por %p101, %p102
      %s105 = sadd.s32 %s104, 1
      %p108 = scmp.eq.s32.totalorder %s14, 1
      %p109 = scmp.ne.s32.totalorder %s104, %s106
      %p110 = scmp.eq.s32.totalorder %s14, 0
      %p111 = por %p109, %p110
      %p112 = scmp.ne.s32.totalorder %s104, %s106
      %p113 = scmp.eq.s32.totalorder %s19, 1
      %p114 = por %p112, %p113
      %p115 = scmp.ne.s32.totalorder %s106, %s107
      %p116 = scmp.eq.s32.totalorder %s19, 0
      %p117 = por %p115, %p116
      %p118 = scmp.ne.s32.totalorder %s106, %s107
      %p119 = scmp.eq.s32.totalorder %s20, 1
      %p120 = por %p118, %p119
      %p122 = scmp.ne.s32.totalorder %s107, %s121
      %p123 = scmp.eq.s32.totalorder %s20, 0
      %p124 = por %p122, %p123
      %s126 = sadd.s32 %s125, 1
      %p129 = scmp.eq.s32.totalorder %s14, 1
      %p130 = scmp.ne.s32.totalorder %s125, %s127
      %p131 = scmp.eq.s32.totalorder %s14, 0
      %p132 = por %p130, %p131
      %p133 = scmp.ne.s32.totalorder %s125, %s127
      %p134 = scmp.eq.s32.totalorder %s19, 1
      %p135 = por %p133, %p134
      %p136 = scmp.ne.s32.totalorder %s127, %s128
      %p137 = scmp.eq.s32.totalorder %s19, 0
      %p138 = por %p136, %p137
      %p139 = scmp.ne.s32.totalorder %s127, %s128
      %p140 = scmp.eq.s32.totalorder %s20, 1
      %p141 = por %p139, %p140
      %p143 = scmp.ne.s32.totalorder %s128, %s142
      %p144 = scmp.eq.s32.totalorder %s20, 0
      %p145 = por %p143, %p144
      %s146 = ssub.s32 %s21, %s33
      %p147 = scmp.eq.s32.totalorder %s146, 0
      %s149 = sadd.s32 %s148, 1
      %s150 = scalar_select %p147, %s148, %s149
      %p153 = pneg %p147
      %p154 = scmp.eq.s32.totalorder %s14, 1
      %p155 = por %p153, %p154
      %p156 = scmp.ne.s32.totalorder %s148, %s151
      %p157 = scmp.eq.s32.totalorder %s14, 0
      %p158 = por %p156, %p157
      %p159 = scmp.ne.s32.totalorder %s148, %s151
      %p160 = scmp.eq.s32.totalorder %s19, 1
      %p161 = por %p159, %p160
      %p162 = scmp.ne.s32.totalorder %s151, %s152
      %p163 = scmp.eq.s32.totalorder %s19, 0
      %p164 = por %p162, %p163
      %p165 = scmp.ne.s32.totalorder %s151, %s152
      %p166 = scmp.eq.s32.totalorder %s20, 1
      %p167 = por %p165, %p166
      %p169 = scmp.ne.s32.totalorder %s152, %s168
      %p170 = scmp.eq.s32.totalorder %s20, 0
      %p171 = por %p169, %p170
      %p172 = scmp.le.s32.totalorder 1, %s14
      %p173 = scmp.lt.s32.totalorder %s14, 3
      %p174 = pnand %p172, %p173
      %p175 = pneg %p174
      // Predicated region
      $region9: #{tpu_custom_call.1} parent=5 // pred_check
        _
      $region10: #{tpu_custom_call.1} parent=5 // pred_check_branch
        %177 = sbr.rel (%p174) target = $region12
      $region11: #{tpu_custom_call.1} parent=5 // pred_region
        %s178 = ssub.s32 %s14, 1
        // Predicated region
        $region13: #{tpu_custom_call.1} parent=11 // pred_check
          %p179 = pneg %p75
        $region14: #{tpu_custom_call.1} parent=11 // pred_check_branch
          %181 = sbr.rel (%p179) target = $region16
        $region15: #{tpu_custom_call.1} parent=11 // pred_region
          _
        $region16: #{tpu_custom_call.1} parent=11 // pred_fallthru
          _
        // Predicated region
        $region17: #{tpu_custom_call.1} parent=11 // pred_check
          %p182 = pneg %p96
        $region18: #{tpu_custom_call.1} parent=11 // pred_check_branch
          %184 = sbr.rel (%p182) target = $region20
        $region19: #{tpu_custom_call.1} parent=11 // pred_region
          _
        $region20: #{tpu_custom_call.1} parent=11 // pred_fallthru
          _
        // Predicated region
        $region21: #{tpu_custom_call.1} parent=11 // pred_check
          %p185 = pneg %p117
        $region22: #{tpu_custom_call.1} parent=11 // pred_check_branch
          %187 = sbr.rel (%p185) target = $region24
        $region23: #{tpu_custom_call.1} parent=11 // pred_region
          _
        $region24: #{tpu_custom_call.1} parent=11 // pred_fallthru
          _
        // Predicated region
        $region25: #{tpu_custom_call.1} parent=11 // pred_check
          %p188 = pneg %p138
        $region26: #{tpu_custom_call.1} parent=11 // pred_check_branch
          %190 = sbr.rel (%p188) target = $region28
        $region27: #{tpu_custom_call.1} parent=11 // pred_region
          _
        $region28: #{tpu_custom_call.1} parent=11 // pred_fallthru
          _
      $region12: #{tpu_custom_call.1} parent=5 // pred_fallthru
        _
      %p191 = scmp.lt.s32.totalorder %s14, 2
      // Predicated region
      $region29: #{tpu_custom_call.1} parent=5 // pred_check
        %p192 = pneg %p191
      $region30: #{tpu_custom_call.1} parent=5 // pred_check_branch
        %194 = sbr.rel (%p192) target = $region32
      $region31: #{tpu_custom_call.1} parent=5 // pred_region
        // Predicated region
        $region33: #{tpu_custom_call.1} parent=31 // pred_check
          %p195 = pneg %p48
        $region34: #{tpu_custom_call.1} parent=31 // pred_check_branch
          %197 = sbr.rel (%p195) target = $region36
        $region35: #{tpu_custom_call.1} parent=31 // pred_region
          %s198 = sand.u32 %s38, 1
          %s199 = scalar_lea.sflag [#allocation4], %s198
          %s200 = sand.u32 %s38, 1
          %s201 = smul.addr %s200, 8
          %s202 = scalar_lea.vmem [#allocation3], %s201
          %s203 = smul.u32 2, %s22
          %s205 = ssub.s32 128, 128
          %206 = vsyncadd %s199, %s205
          %s207 = smul.addr %s21, 2
          %s208 = sadd.s32 %s203, %s207
          %s209 = smul.addr %s208, 64
          %s210 = scalar_lea.hbm %s0, %s209
          %s212 = sshll.u32 %s202, 4
          %s213 = int_to_ptr.vmem [resolvable:$true] %s212
          %215 = dma.hbm_to_vmem [thread:$0]  %s210, 128, %s213, %s199
        $region36: #{tpu_custom_call.1} parent=31 // pred_fallthru
          _
      $region32: #{tpu_custom_call.1} parent=5 // pred_fallthru
        _
      %p216 = scmp.le.s32.totalorder 1, %s14
      %p217 = scmp.lt.s32.totalorder %s14, 3
      %p218 = pnand %p216, %p217
      %p219 = pneg %p218
      // Predicated region
      $region37: #{tpu_custom_call.1} parent=5 // pred_check
        _
      $region38: #{tpu_custom_call.1} parent=5 // pred_check_branch
        %221 = sbr.rel (%p218) target = $region40
      $region39: #{tpu_custom_call.1} parent=5 // pred_region
        %s222 = ssub.s32 %s14, 1
        %s223 = sand.u32 %s41, 1
        %s224 = scalar_lea.sflag [#allocation4], %s223
        %s225 = sand.u32 %s41, 1
        %s226 = smul.addr %s225, 8
        %s227 = scalar_lea.vmem [#allocation3], %s226
        // Predicated region
        $region41: #{tpu_custom_call.1} parent=39 // pred_check
          %p228 = pneg %p54
        $region42: #{tpu_custom_call.1} parent=39 // pred_check_branch
          %230 = sbr.rel (%p228) target = $region44
        $region43: #{tpu_custom_call.1} parent=39 // pred_region
          %231 = dma.done %s224, 128
        $region44: #{tpu_custom_call.1} parent=39 // pred_fallthru
          _
        %s232 = sand.u32 %s41, 1
        %s233 = scalar_lea.sflag [#allocation4], %s232
        %s234 = sand.u32 %s41, 1
        %s235 = smul.addr %s234, 8
        %s236 = scalar_lea.vmem [#allocation3], %s235
        %p237 = pneg %p54
        %p238 = pneg %p51
        %p239 = pneg %p75
        %p240 = pneg %p72
        %p241 = pneg %p96
        %p242 = pneg %p93
        %p243 = pneg %p117
        %p244 = pneg %p114
        %p245 = pneg %p138
        %p246 = pneg %p135
        %p247 = pneg %p164
        %p248 = pneg %p161
        %p249 = scmp.lt.s32.totalorder %s23, 1
        %s250 = scalar_select %p249, %s23, 1
        %s251 = smul.addr %s250, 4
        %s252 = scalar_lea.vmem %s5, %s251
        %s253 = smul.u32 2, %s24
        %p254 = scmp.lt.s32.totalorder %s23, 1
        %s255 = scalar_select %p254, %s23, 1
        %s256 = smul.addr %s255, 4
        %s257 = scalar_lea.vmem %s5, %s256
        %p258 = scmp.eq.s32.totalorder %s24, 0
        // Predicated region
        $region45: #{tpu_custom_call.1} parent=39 // pred_check
          %p259 = pneg %p258
        $region46: #{tpu_custom_call.1} parent=39 // pred_check_branch
          %261 = sbr.rel (%p259) target = $region48
        $region47: #{tpu_custom_call.1} parent=39 // pred_region
          %vm262 = vcmask 24576
          %263 = vst.msk [vmem:[#allocation2] sm:$0x1] %vm262, 0.0
        $region48: #{tpu_custom_call.1} parent=39 // pred_fallthru
          _
        %v264 = vld [vmem:[#allocation2] sm:$0x1]
        %v265 = vld [vmem:[%s227] sm:$0xff]
        %v267 = vcombine.high %v265, %v265
        %vm269 = vcmask 1043456
        %v270 = vsel %vm269, %v265, 0.0
        %v271 = vsel %vm269, %v267, 0.0
        %v272 = vadd.f32 %v270, %v271
        %273 = vadd.xlane.f32.xlu0 %v272
        %v274 = vpop.xlane.xlu0 %273
        %v276 = vlaneseq
        %v277 = vshrl.u32 %v276, 7
        %v278 = vsub.s32 0, %v277
        %v279 = vrot.slane %v274, %v278
        %v280 = vlaneseq
        %v281 = vshrl.u32 %v280, 7
        %v282 = vsub.s32 1, %v281
        %v283 = vrot.slane %v274, %v282
        %v284 = vlaneseq
        %v285 = vshrl.u32 %v284, 7
        %v286 = vsub.s32 2, %v285
        %v287 = vrot.slane %v274, %v286
        %v288 = vlaneseq
        %v289 = vshrl.u32 %v288, 7
        %v290 = vsub.s32 3, %v289
        %v291 = vrot.slane %v274, %v290
        %v292 = vcombine.low %v279, %v283
        %v293 = vcombine.low %v287, %v291
        %v295 = vunpack.c.l.s4 1966171168
        %v296 = vunpack.c.0.s8 %v295
        %v297 = vlaneseq
        %v298 = vshrl.u32 %v297, 7
        %v299 = vsub.s32 %v296, %v298
        %v300 = vrot.slane %v292, %v299
        %v302 = vunpack.c.l.s4 1966171168
        %v303 = vunpack.c.0.s8 %v302
        %v304 = vlaneseq
        %v305 = vshrl.u32 %v304, 7
        %v306 = vsub.s32 %v303, %v305
        %v307 = vrot.slane %v293, %v306
        %v308 = vcombine.low %v300, %v307
        %v310 = vunpack.c.l.s4 1966171168
        %v311 = vunpack.c.0.s8 %v310
        %v312 = vlaneseq
        %v313 = vshrl.u32 %v312, 7
        %v314 = vsub.s32 %v311, %v313
        %v315 = vrot.slane %v308, %v314
        %316 = vset.pattern.permute.xlu0 0
        %317 = vperm.xlu0 %316, %v315
        %v318 = vpop.permute.xlu0 %317
        %v319 = vlaneseq
        %v320 = vand.u32 %v319, 127
        %v321 = vlaneseq
        %v322 = vshrl.u32 %v321, 7
        %v323 = vsub.s32 %v320, %v322
        %v324 = vrot.slane %v318, %v323
        %v326 = vunpack.c.l.s4 1966171168
        %v327 = vunpack.c.0.s8 %v326
        %v328 = vlaneseq
        %v329 = vshrl.u32 %v328, 7
        %v330 = vsub.s32 %v327, %v329
        %v331 = vrot.slane %v324, %v330
        %v333 = vunpack.c.l.s4 1966171168
        %v334 = vunpack.c.0.s8 %v333
        %v335 = vlaneseq
        %v336 = vshrl.u32 %v335, 7
        %v337 = vsub.s32 %v334, %v336
        %v338 = vrot.slane %v331, %v337
        %v340 = vadd.f32 %v264, %v338
        %vm341 = vcmask 24576
        %342 = vst.msk [vmem:[#allocation2] sm:$0x1] %vm341, %v340
        // Predicated region
        $region49: #{tpu_custom_call.1} parent=39 // pred_check
          %p343 = pneg %p258
        $region50: #{tpu_custom_call.1} parent=39 // pred_check_branch
          %345 = sbr.rel (%p343) target = $region52
        $region51: #{tpu_custom_call.1} parent=39 // pred_region
          %v346 = vld [vmem:[#allocation2] sm:$0x1]
          %v347 = vmul.f32 %v346, 0.00390625
          %v348 = vld [vmem:[%s1] sm:$0xf]
          %v349 = vld [vmem:[%s2] sm:$0x1]
          %vm350 = vcmask 31744
          %v352 = vsel %vm350, %v347, 0
          %v355 = vsel %vm269, %v348, 0
          %357 = vmatprep.subr.mxu0 0.0
          %358 = vmatpush1.msra.mxu0 %v355
          %359 = vmatprep.subr.mxu0 0.0
          %360 = vmatpush1.msra.mxu0 0.0
          %361 = vmatprep.subr.mxu0 0.0
          %362 = vmatpush1.msra.mxu0 0.0
          %363 = vmatprep.subr.mxu0 0.0
          %364 = vmatpush1.msra.mxu0 0.0
          %365 = vmatprep.subr.mxu0 0.0
          %366 = vmatpush1.msra.mxu0 0.0
          %367 = vmatprep.subr.mxu0 0.0
          %368 = vmatpush1.msra.mxu0 0.0
          %369 = vmatprep.subr.mxu0 0.0
          %370 = vmatpush1.msra.mxu0 0.0
          %371 = vmatprep.subr.mxu0 0.0
          %372 = vmatpush1.msra.mxu0 0.0
          %373 = vmatprep.subr.mxu0 0.0
          %374 = vmatpush1.msra.mxu0 0.0
          %375 = vmatprep.subr.mxu0 0.0
          %376 = vmatpush1.msra.mxu0 0.0
          %377 = vmatprep.subr.mxu0 0.0
          %378 = vmatpush1.msra.mxu0 0.0
          %379 = vmatprep.subr.mxu0 0.0
          %380 = vmatpush1.msra.mxu0 0.0
          %381 = vmatprep.subr.mxu0 0.0
          %382 = vmatpush1.msra.mxu0 0.0
          %383 = vmatprep.subr.mxu0 0.0
          %384 = vmatpush1.msra.mxu0 0.0
          %385 = vmatprep.subr.mxu0 0.0
          %386 = vmatpush1.msra.mxu0 0.0
          %387 = vmatprep.subr.mxu0 0.0
          %388 = vmatpush1.msra.mxu0 0.0
          %389 = vmatprep.subr.mxu0 0.0
          %390 = vmatpush1.msra.mxu0 0.0
          %391 = vmatprep.subr.mxu0 0.0
          %392 = vmatpush1.msra.mxu0 0.0
          %393 = vmatprep.subr.mxu0 0.0
          %394 = vmatpush1.msra.mxu0 0.0
          %395 = vmatprep.subr.mxu0 0.0
          %396 = vmatpush1.msra.mxu0 0.0
          %397 = vmatprep.subr.mxu0 0.0
          %398 = vmatpush1.msra.mxu0 0.0
          %399 = vmatprep.subr.mxu0 0.0
          %400 = vmatpush1.msra.mxu0 0.0
          %401 = vmatprep.subr.mxu0 0.0
          %402 = vmatpush1.msra.mxu0 0.0
          %403 = vmatprep.subr.mxu0 0.0
          %404 = vmatpush1.msra.mxu0 0.0
          %405 = vmatprep.subr.mxu0 0.0
          %406 = vmatpush1.msra.mxu0 0.0
          %407 = vmatprep.subr.mxu0 0.0
          %408 = vmatpush1.msra.mxu0 0.0
          %409 = vmatprep.subr.mxu0 0.0
          %410 = vmatpush1.msra.mxu0 0.0
          %411 = vmatprep.subr.mxu0 0.0
          %412 = vmatpush1.msra.mxu0 0.0
          %413 = vmatprep.subr.mxu0 0.0
          %414 = vmatpush1.msra.mxu0 0.0
          %415 = vmatprep.subr.mxu0 0.0
          %416 = vmatpush1.msra.mxu0 0.0
          %417 = vmatprep.subr.mxu0 0.0
          %418 = vmatpush1.msra.mxu0 0.0
          %419 = vmatprep.subr.mxu0 0.0
          %420 = vmatpush1.msra.mxu0 0.0
          %421 = vmatprep.mubr.f32.mxu0 0.0
          %422 = vmatmul.mubr.f32.gmra.mrb[0].mxu0 %v352
          %v423 = vpop.f32.mrb[0].mxu0
          %v424 = vadd.f32 %v349, %v423
          %v425 = vpop.f32.mrb[0].mxu0
          %426 = vdwg.mxu0
          %v427 = vmax.f32 %v424, 0.0
          %v428 = vld [vmem:[%s3] sm:$0x3]
          %v429 = vld [vmem:[%s4] sm:$0x1]
          %vm430 = vcmask 15360
          %v432 = vsel %vm430, %v427, 0
          %vm434 = vcmask 1041408
          %v436 = vsel %vm434, %v428, 0
          %438 = vmatprep.subr.mxu0 0.0
          %439 = vmatpush1.msra.mxu0 %v436
          %440 = vmatprep.subr.mxu0 0.0
          %441 = vmatpush1.msra.mxu0 0.0
          %442 = vmatprep.subr.mxu0 0.0
          %443 = vmatpush1.msra.mxu0 0.0
          %444 = vmatprep.subr.mxu0 0.0
          %445 = vmatpush1.msra.mxu0 0.0
          %446 = vmatprep.subr.mxu0 0.0
          %447 = vmatpush1.msra.mxu0 0.0
          %448 = vmatprep.subr.mxu0 0.0
          %449 = vmatpush1.msra.mxu0 0.0
          %450 = vmatprep.subr.mxu0 0.0
          %451 = vmatpush1.msra.mxu0 0.0
          %452 = vmatprep.subr.mxu0 0.0
          %453 = vmatpush1.msra.mxu0 0.0
          %454 = vmatprep.subr.mxu0 0.0
          %455 = vmatpush1.msra.mxu0 0.0
          %456 = vmatprep.subr.mxu0 0.0
          %457 = vmatpush1.msra.mxu0 0.0
          %458 = vmatprep.subr.mxu0 0.0
          %459 = vmatpush1.msra.mxu0 0.0
          %460 = vmatprep.subr.mxu0 0.0
          %461 = vmatpush1.msra.mxu0 0.0
          %462 = vmatprep.subr.mxu0 0.0
          %463 = vmatpush1.msra.mxu0 0.0
          %464 = vmatprep.subr.mxu0 0.0
          %465 = vmatpush1.msra.mxu0 0.0
          %466 = vmatprep.subr.mxu0 0.0
          %467 = vmatpush1.msra.mxu0 0.0
          %468 = vmatprep.subr.mxu0 0.0
          %469 = vmatpush1.msra.mxu0 0.0
          %470 = vmatprep.subr.mxu0 0.0
          %471 = vmatpush1.msra.mxu0 0.0
          %472 = vmatprep.subr.mxu0 0.0
          %473 = vmatpush1.msra.mxu0 0.0
          %474 = vmatprep.subr.mxu0 0.0
          %475 = vmatpush1.msra.mxu0 0.0
          %476 = vmatprep.subr.mxu0 0.0
          %477 = vmatpush1.msra.mxu0 0.0
          %478 = vmatprep.subr.mxu0 0.0
          %479 = vmatpush1.msra.mxu0 0.0
          %480 = vmatprep.subr.mxu0 0.0
          %481 = vmatpush1.msra.mxu0 0.0
          %482 = vmatprep.subr.mxu0 0.0
          %483 = vmatpush1.msra.mxu0 0.0
          %484 = vmatprep.subr.mxu0 0.0
          %485 = vmatpush1.msra.mxu0 0.0
          %486 = vmatprep.subr.mxu0 0.0
          %487 = vmatpush1.msra.mxu0 0.0
          %488 = vmatprep.subr.mxu0 0.0
          %489 = vmatpush1.msra.mxu0 0.0
          %490 = vmatprep.subr.mxu0 0.0
          %491 = vmatpush1.msra.mxu0 0.0
          %492 = vmatprep.subr.mxu0 0.0
          %493 = vmatpush1.msra.mxu0 0.0
          %494 = vmatprep.subr.mxu0 0.0
          %495 = vmatpush1.msra.mxu0 0.0
          %496 = vmatprep.subr.mxu0 0.0
          %497 = vmatpush1.msra.mxu0 0.0
          %498 = vmatprep.subr.mxu0 0.0
          %499 = vmatpush1.msra.mxu0 0.0
          %500 = vmatprep.subr.mxu0 0.0
          %501 = vmatpush1.msra.mxu0 0.0
          %502 = vmatprep.mubr.f32.mxu0 0.0
          %503 = vmatmul.mubr.f32.gmra.mrb[0].mxu0 %v432
          %v504 = vpop.f32.mrb[0].mxu0
          %v505 = vadd.f32 %v429, %v504
          %v506 = vpop.f32.mrb[0].mxu0
          %507 = vdwg.mxu0
          %v508 = vxor.u32 %v505, 2147483648
          %v509 = vmul.f32 %v508, 1.442695
          %v510 = vpow.pop %v509
          %v511 = vadd.f32 %v510, 1.0
          %v512 = vrcp.pop %v511
          %v513 = vmul.f32 1.0, %v512
          %v514 = vlaneseq
          %v515 = vshrl.u32 %v514, 7
          %v516 = vsub.s32 0, %v515
          %v517 = vrot.slane %v513, %v516
          %519 = vbcast.lane.b32.xlu0 %v517, 256
          %v520 = vpop.permute.xlu0 %519
          %vm521 = vcmask 3072
          %522 = vst.msk [vmem:[%s257] sm:$0xf] %vm521, %v520
        $region52: #{tpu_custom_call.1} parent=39 // pred_fallthru
          _
        %p523 = scmp.lt.s32.totalorder %s23, 1
        %s524 = scalar_select %p523, %s23, 1
        %s525 = smul.addr %s524, 4
        %s526 = scalar_lea.vmem %s5, %s525
        // Predicated region
        $region53: #{tpu_custom_call.1} parent=39 // pred_check
          %p527 = pneg %p161
        $region54: #{tpu_custom_call.1} parent=39 // pred_check_branch
          %529 = sbr.rel (%p527) target = $region56
        $region55: #{tpu_custom_call.1} parent=39 // pred_region
          _
        $region56: #{tpu_custom_call.1} parent=39 // pred_fallthru
          _
      $region40: #{tpu_custom_call.1} parent=5 // pred_fallthru
        _
      %p530 = scmp.le.s32.totalorder 2, %s14
      // Predicated region
      $region57: #{tpu_custom_call.1} parent=5 // pred_check
        %p531 = pneg %p530
      $region58: #{tpu_custom_call.1} parent=5 // pred_check_branch
        %533 = sbr.rel (%p531) target = $region60
      $region59: #{tpu_custom_call.1} parent=5 // pred_region
        %s534 = ssub.s32 %s14, 2
        // Predicated region
        $region61: #{tpu_custom_call.1} parent=59 // pred_check
          %p535 = pneg %p167
        $region62: #{tpu_custom_call.1} parent=59 // pred_check_branch
          %537 = sbr.rel (%p535) target = $region64
        $region63: #{tpu_custom_call.1} parent=59 // pred_region
          %p538 = scmp.lt.s32.totalorder %s25, 1
          %s539 = scalar_select %p538, %s25, 1
          %s540 = smul.addr %s539, 4
          %s541 = scalar_lea.vmem %s5, %s540
        $region64: #{tpu_custom_call.1} parent=59 // pred_fallthru
          _
      $region60: #{tpu_custom_call.1} parent=5 // pred_fallthru
        _
    $region6: #{tpu_custom_call.1} parent=1 // loop_footer
      %s18 = sadd.s32 1, %s14
    $region7: #{tpu_custom_call.1} parent=1 // loop_footer_branch
      %13 = sbr.rel target = $region3
    $region8: #{tpu_custom_call.1} parent=1 // loop_exit
      _
    %542 = vsyncpa [#allocation4], 1
    %s543 = scalar_lea.sflag [#allocation4], 1
    %544 = vsyncpa %s543, 1

</llo_original>
